<compile_context>
chip_gen: v6e
topology: v6e:2x2x1
jax: 0.10.0
libtpu: 0.0.40
codegen_flags: <defaults>
</compile_context>

<pallas_src>
import functools
import math

import jax
import jax.numpy as jnp
from jax.experimental import pallas as pl
from jax.experimental.pallas import tpu as pltpu


def hamming_window(window_size: int):
    # torch.hamming_window defaults: periodic=True, alpha=0.54, beta=0.46
    n = jnp.arange(window_size, dtype=jnp.float32)
    return 0.54 - 0.46 * jnp.cos(2.0 * jnp.pi * n / window_size)


def _make_kernel(num_layers: int, hidden_size: int, output_size: int,
                 seq_len: int, batch_padded: int):
    L, H, O, S, Bp = num_layers, hidden_size, output_size, seq_len, batch_padded
    LH = L * H
    NS = S + L - 1                      # wavefront steps

    def kernel(frames_ref, w_in_ref, b_in_ref, k_ref, w_lin_ref, b_lin_ref,
               out_ref):
        # ---- bulk input projection (one MXU matmul, off the serial chain) ---
        # W_in = [window*w_ih0 | 0...], b_in = [b_ih0+b_hh0 | b_ih1+b_hh1 | ...]
        # Row block s (Bp sublane-aligned rows) is the additive input of
        # wavefront step s for every layer (bias for layers > 0).
        xin = (jnp.dot(frames_ref[...], w_in_ref[...],
                       preferred_element_type=jnp.float32)
               + b_in_ref[...])                                # (NS*Bp, L*H)

        k = k_ref[...]                                         # (L*H, L*H)
        col = jax.lax.broadcasted_iota(jnp.int32, (Bp, LH), 1)

        # ---- wavefront recurrence -------------------------------------------
        # Step 0: carried state is zero -> skip the matmul; layers that have
        # not started yet must stay exactly zero (mask, not bias-tanh).
        g = jnp.where(col < H, jnp.tanh(xin[0:Bp, :]), 0.0)    # (Bp, L*H)

        # Steps 1 .. NS-1: ONE MXU push + ONE tanh per step.  Layer l at step s
        # computes timestep t = s - l, consuming layer l-1's previous-step
        # output carried in g; garbage cells (t < 0 masked, t > S-1 never feed
        # valid cells) stay isolated.
        for s in range(1, NS):          # NS small -> static unroll is fine
            g = jnp.tanh(xin[s * Bp:(s + 1) * Bp, :]
                         + jnp.dot(g, k, preferred_element_type=jnp.float32))
            if s < L - 1:               # layers l > s have not started yet
                g = jnp.where(col < (s + 1) * H, g, 0.0)

        # Last layer's hidden state at t = S-1 lives in the last H columns.
        h_last = g[:, (L - 1) * H:]                            # (Bp, H)

        # ---- linear head -----------------------------------------------------
        logits = (jnp.dot(h_last, w_lin_ref[...],
                          preferred_element_type=jnp.float32)
                  + b_lin_ref[...])                            # (Bp, O)

        # ---- greedy decode: first maximal index (matches torch.argmax) ------
        ids = jax.lax.broadcasted_iota(jnp.int32, logits.shape, 1)
        maxv = jnp.max(logits, axis=-1, keepdims=True)
        cand = jnp.where(logits == maxv, ids, jnp.int32(O))
        out_ref[...] = jnp.min(cand, axis=-1, keepdims=True)   # (Bp, 1)

    return kernel


def init_params(key, input_size, hidden_size, output_size, num_layers):
    """Deterministic synthetic params, PyTorch-style uniform(-1/sqrt(H), 1/sqrt(H))."""
    params = []
    k = 1.0 / math.sqrt(hidden_size)
    keys = jax.random.split(key, num_layers * 4 + 2)
    ki = 0
    for layer in range(num_layers):
        in_sz = input_size if layer == 0 else hidden_size
        w_ih = jax.random.uniform(keys[ki], (in_sz, hidden_size), jnp.float32, -k, k); ki += 1
        w_hh = jax.random.uniform(keys[ki], (hidden_size, hidden_size), jnp.float32, -k, k); ki += 1
        b_ih = jax.random.uniform(keys[ki], (1, hidden_size), jnp.float32, -k, k); ki += 1
        b_hh = jax.random.uniform(keys[ki], (1, hidden_size), jnp.float32, -k, k); ki += 1
        params += [w_ih, w_hh, b_ih, b_hh]
    w_lin = jax.random.uniform(keys[ki], (hidden_size, output_size), jnp.float32, -k, k); ki += 1
    b_lin = jax.random.uniform(keys[ki], (1, output_size), jnp.float32, -k, k)
    params += [w_lin, b_lin]
    return params


def speech_recognizer_forward(x, params, *, window_size, window_stride,
                              hidden_size, output_size, num_layers):
    B, C, T = x.shape
    # TODO(synk): the reference PyTorch code feeds a 4-D (B, S, C, W) tensor to
    # nn.RNN (which would raise); we follow the intended semantics with C == 1
    # squeezed so the RNN input_size == window_size.
    assert C == 1, "kernel assumes a single input channel"
    W, H, O, L = window_size, hidden_size, output_size, num_layers
    S = (T - W) // window_stride + 1
    NS = S + L - 1
    Bp = max(8, ((B + 7) // 8) * 8)     # pad batch to a sublane multiple

    # ---- wrapper-side, weight/layout-only preprocessing (tiny, one-time) ----
    x2 = x[:, 0, :]                                            # (B, T)
    xb = jnp.pad(x2, ((0, Bp - B), (0, 0)))                    # (Bp, T)

    # Step-major, sublane-dense unfold: frames[s*Bp + b, :] = xb[b, s*stride:+W].
    gather_idx = (jnp.arange(S)[:, None] * window_stride
                  + jnp.arange(W)[None, :])                    # (S, W)
    frames = xb[:, gather_idx]                                 # (Bp, S, W)
    frames = jnp.transpose(frames, (1, 0, 2)).reshape(S * Bp, W)
    frames = jnp.pad(frames, ((0, (L - 1) * Bp), (0, 0)))      # (NS*Bp, W)

    window = hamming_window(W)                                 # (W,)

    w_ih = [params[l * 4] for l in range(L)]
    w_hh = [params[l * 4 + 1] for l in range(L)]
    b_ih = [params[l * 4 + 2] for l in range(L)]
    b_hh = [params[l * 4 + 3] for l in range(L)]
    w_lin, b_lin = params[L * 4], params[L * 4 + 1]

    # Combined input-projection weight: Hamming window folded into layer-0
    # weights; zero columns for layers > 0 (their "input" comes from K below).
    w_in0 = w_ih[0] * window[:, None]                          # (W, H)
    if L > 1:
        w_in = jnp.concatenate(
            [w_in0, jnp.zeros((W, (L - 1) * H), jnp.float32)], axis=1)
    else:
        w_in = w_in0                                           # (W, L*H)
    # Combined per-layer bias (b_ih + b_hh folded), laid out along columns.
    b_in = jnp.concatenate([b_ih[l] + b_hh[l] for l in range(L)], axis=1)  # (1, L*H)

    # Block-structured wavefront weight: K[l,l] = W_hh_l, K[l-1,l] = W_ih_l.
    k = jnp.zeros((L * H, L * H), jnp.float32)
    for l in range(L):
        k = k.at[l * H:(l + 1) * H, l * H:(l + 1) * H].set(w_hh[l])
        if l >= 1:
            k = k.at[(l - 1) * H:l * H, l * H:(l + 1) * H].set(w_ih[l])

    kernel = _make_kernel(L, H, O, S, Bp)
    vmem = pltpu.MemorySpace.VMEM
    kernel_inputs = [frames, w_in, b_in, k, w_lin, b_lin]
    out = pl.pallas_call(
        kernel,
        out_shape=jax.ShapeDtypeStruct((Bp, 1), jnp.int32),
        in_specs=[pl.BlockSpec(memory_space=vmem) for _ in kernel_inputs],
        out_specs=pl.BlockSpec(memory_space=vmem),
    )(*kernel_inputs)
    return out[:B, 0]                                          # (B,) class ids


# ---- pure-JAX reference (layer-by-layer, un-fused) for a correctness check --
def _reference_logits(x, params, *, window_size, window_stride,
                      hidden_size, output_size, num_layers):
    B, _, T = x.shape
    S = (T - window_size) // window_stride + 1
    window = hamming_window(window_size)
    x2 = x[:, 0, :]
    frames = jnp.stack(
        [x2[:, t * window_stride:t * window_stride + window_size]
         for t in range(S)], axis=1) * window                  # (B, S, W)
    inp = frames
    for l in range(num_layers):
        w_ih, w_hh, b_ih, b_hh = params[l * 4:l * 4 + 4]
        h = jnp.zeros((B, hidden_size), jnp.float32)
        outs = []
        for t in range(S):
            h = jnp.tanh(inp[:, t, :] @ w_ih + b_ih + h @ w_hh + b_hh)
            outs.append(h)
        inp = jnp.stack(outs, axis=1)
    w_lin, b_lin = params[num_layers * 4], params[num_layers * 4 + 1]
    return inp[:, -1, :] @ w_lin + b_lin                       # (B, O)


if __name__ == "__main__":
    B, T = 2, 64
    window_size, window_stride = 16, 8
    hidden_size, output_size, num_layers = 32, 16, 2
    input_size = window_size  # RNN input size implied by the windowing

    key = jax.random.PRNGKey(0)
    kx, kp = jax.random.split(key)
    x = jax.random.normal(kx, (B, 1, T), jnp.float32)
    params = init_params(kp, input_size, hidden_size, output_size, num_layers)

    fwd = jax.jit(functools.partial(
        speech_recognizer_forward,
        window_size=window_size, window_stride=window_stride,
        hidden_size=hidden_size, output_size=output_size,
        num_layers=num_layers))
    out = fwd(x, params)
    jax.block_until_ready(out)
    assert out.shape == (B,) and out.dtype == jnp.int32

    # Tie-robust correctness check: the logit of the kernel-chosen class must
    # equal the reference max logit (up to fp reassociation noise).
    ref_logits = _reference_logits(
        x, params, window_size=window_size, window_stride=window_stride,
        hidden_size=hidden_size, output_size=output_size, num_layers=num_layers)
    chosen = ref_logits[jnp.arange(B), out]
    assert bool(jnp.all(jnp.max(ref_logits, axis=-1) - chosen <= 1e-4))

    print("KERNEL_OK")
</pallas_src>

<mosaic_0001>
module attributes {stable_mosaic.version = 11 : i64} {
  func.func @kernel(%arg0: memref<64x16xf32, #tpu.memory_space<vmem>>, %arg1: memref<16x64xf32, #tpu.memory_space<vmem>>, %arg2: memref<1x64xf32, #tpu.memory_space<vmem>>, %arg3: memref<64x64xf32, #tpu.memory_space<vmem>>, %arg4: memref<32x16xf32, #tpu.memory_space<vmem>>, %arg5: memref<1x16xf32, #tpu.memory_space<vmem>>, %arg6: memref<8x1xi32, #tpu.memory_space<vmem>>) attributes {dimension_semantics = [], scalar_prefetch = 0 : i64, scratch_operands = 0 : i64, tpu.core_type = #tpu.core_type<tc>} {
    %c0 = arith.constant 0 : index
    %c0_0 = arith.constant 0 : index
    %0 = vector.load %arg0[%c0, %c0_0] : memref<64x16xf32, #tpu.memory_space<vmem>>, vector<64x16xf32>
    %c0_1 = arith.constant 0 : index
    %c0_2 = arith.constant 0 : index
    %1 = vector.load %arg1[%c0_1, %c0_2] : memref<16x64xf32, #tpu.memory_space<vmem>>, vector<16x64xf32>
    %cst = arith.constant dense<0.000000e+00> : vector<64x64xf32>
    %2 = tpu.matmul %0, %1, %cst {dimension_numbers = #tpu.dot_dimension_numbers<[1], [0], [0], [1], [0, 0, 1, 1], [], []>} : vector<64x16xf32>, vector<16x64xf32>, vector<64x64xf32> -> vector<64x64xf32>
    %c0_3 = arith.constant 0 : index
    %c0_4 = arith.constant 0 : index
    %3 = vector.load %arg2[%c0_3, %c0_4] : memref<1x64xf32, #tpu.memory_space<vmem>>, vector<1x64xf32>
    %4 = vector.broadcast %3 : vector<1x64xf32> to vector<64x64xf32>
    %5 = arith.addf %2, %4 : vector<64x64xf32>
    %c0_5 = arith.constant 0 : index
    %c0_6 = arith.constant 0 : index
    %6 = vector.load %arg3[%c0_5, %c0_6] : memref<64x64xf32, #tpu.memory_space<vmem>>, vector<64x64xf32>
    %7 = tpu.iota {dimensions = array<i32: 1>} : vector<8x64xi32>
    %c32_i32 = arith.constant 32 : i32
    %8 = vector.broadcast %c32_i32 : i32 to vector<8x64xi32>
    %9 = arith.cmpi slt, %7, %8 : vector<8x64xi32>
    %10 = vector.extract_strided_slice %5 {offsets = [0, 0], sizes = [8, 64], strides = [1, 1]} : vector<64x64xf32> to vector<8x64xf32>
    %11 = math.tanh %10 : vector<8x64xf32>
    %cst_7 = arith.constant 0.000000e+00 : f32
    %12 = vector.broadcast %cst_7 : f32 to vector<8x64xf32>
    %13 = arith.select %9, %11, %12 : vector<8x64xi1>, vector<8x64xf32>
    %14 = vector.extract_strided_slice %5 {offsets = [8, 0], sizes = [8, 64], strides = [1, 1]} : vector<64x64xf32> to vector<8x64xf32>
    %cst_8 = arith.constant dense<0.000000e+00> : vector<8x64xf32>
    %15 = tpu.matmul %13, %6, %cst_8 {dimension_numbers = #tpu.dot_dimension_numbers<[1], [0], [0], [1], [0, 0, 1, 1], [], []>} : vector<8x64xf32>, vector<64x64xf32>, vector<8x64xf32> -> vector<8x64xf32>
    %16 = arith.addf %14, %15 : vector<8x64xf32>
    %17 = math.tanh %16 : vector<8x64xf32>
    %18 = vector.extract_strided_slice %5 {offsets = [16, 0], sizes = [8, 64], strides = [1, 1]} : vector<64x64xf32> to vector<8x64xf32>
    %cst_9 = arith.constant dense<0.000000e+00> : vector<8x64xf32>
    %19 = tpu.matmul %17, %6, %cst_9 {dimension_numbers = #tpu.dot_dimension_numbers<[1], [0], [0], [1], [0, 0, 1, 1], [], []>} : vector<8x64xf32>, vector<64x64xf32>, vector<8x64xf32> -> vector<8x64xf32>
    %20 = arith.addf %18, %19 : vector<8x64xf32>
    %21 = math.tanh %20 : vector<8x64xf32>
    %22 = vector.extract_strided_slice %5 {offsets = [24, 0], sizes = [8, 64], strides = [1, 1]} : vector<64x64xf32> to vector<8x64xf32>
    %cst_10 = arith.constant dense<0.000000e+00> : vector<8x64xf32>
    %23 = tpu.matmul %21, %6, %cst_10 {dimension_numbers = #tpu.dot_dimension_numbers<[1], [0], [0], [1], [0, 0, 1, 1], [], []>} : vector<8x64xf32>, vector<64x64xf32>, vector<8x64xf32> -> vector<8x64xf32>
    %24 = arith.addf %22, %23 : vector<8x64xf32>
    %25 = math.tanh %24 : vector<8x64xf32>
    %26 = vector.extract_strided_slice %5 {offsets = [32, 0], sizes = [8, 64], strides = [1, 1]} : vector<64x64xf32> to vector<8x64xf32>
    %cst_11 = arith.constant dense<0.000000e+00> : vector<8x64xf32>
    %27 = tpu.matmul %25, %6, %cst_11 {dimension_numbers = #tpu.dot_dimension_numbers<[1], [0], [0], [1], [0, 0, 1, 1], [], []>} : vector<8x64xf32>, vector<64x64xf32>, vector<8x64xf32> -> vector<8x64xf32>
    %28 = arith.addf %26, %27 : vector<8x64xf32>
    %29 = math.tanh %28 : vector<8x64xf32>
    %30 = vector.extract_strided_slice %5 {offsets = [40, 0], sizes = [8, 64], strides = [1, 1]} : vector<64x64xf32> to vector<8x64xf32>
    %cst_12 = arith.constant dense<0.000000e+00> : vector<8x64xf32>
    %31 = tpu.matmul %29, %6, %cst_12 {dimension_numbers = #tpu.dot_dimension_numbers<[1], [0], [0], [1], [0, 0, 1, 1], [], []>} : vector<8x64xf32>, vector<64x64xf32>, vector<8x64xf32> -> vector<8x64xf32>
    %32 = arith.addf %30, %31 : vector<8x64xf32>
    %33 = math.tanh %32 : vector<8x64xf32>
    %34 = vector.extract_strided_slice %5 {offsets = [48, 0], sizes = [8, 64], strides = [1, 1]} : vector<64x64xf32> to vector<8x64xf32>
    %cst_13 = arith.constant dense<0.000000e+00> : vector<8x64xf32>
    %35 = tpu.matmul %33, %6, %cst_13 {dimension_numbers = #tpu.dot_dimension_numbers<[1], [0], [0], [1], [0, 0, 1, 1], [], []>} : vector<8x64xf32>, vector<64x64xf32>, vector<8x64xf32> -> vector<8x64xf32>
    %36 = arith.addf %34, %35 : vector<8x64xf32>
    %37 = math.tanh %36 : vector<8x64xf32>
    %38 = vector.extract_strided_slice %5 {offsets = [56, 0], sizes = [8, 64], strides = [1, 1]} : vector<64x64xf32> to vector<8x64xf32>
    %cst_14 = arith.constant dense<0.000000e+00> : vector<8x64xf32>
    %39 = tpu.matmul %37, %6, %cst_14 {dimension_numbers = #tpu.dot_dimension_numbers<[1], [0], [0], [1], [0, 0, 1, 1], [], []>} : vector<8x64xf32>, vector<64x64xf32>, vector<8x64xf32> -> vector<8x64xf32>
    %40 = arith.addf %38, %39 : vector<8x64xf32>
    %41 = math.tanh %40 : vector<8x64xf32>
    %42 = vector.extract_strided_slice %41 {offsets = [0, 32], sizes = [8, 32], strides = [1, 1]} : vector<8x64xf32> to vector<8x32xf32>
    %c0_15 = arith.constant 0 : index
    %c0_16 = arith.constant 0 : index
    %43 = vector.load %arg4[%c0_15, %c0_16] : memref<32x16xf32, #tpu.memory_space<vmem>>, vector<32x16xf32>
    %cst_17 = arith.constant dense<0.000000e+00> : vector<8x16xf32>
    %44 = tpu.matmul %42, %43, %cst_17 {dimension_numbers = #tpu.dot_dimension_numbers<[1], [0], [0], [1], [0, 0, 1, 1], [], []>} : vector<8x32xf32>, vector<32x16xf32>, vector<8x16xf32> -> vector<8x16xf32>
    %c0_18 = arith.constant 0 : index
    %c0_19 = arith.constant 0 : index
    %45 = vector.load %arg5[%c0_18, %c0_19] : memref<1x16xf32, #tpu.memory_space<vmem>>, vector<1x16xf32>
    %46 = vector.broadcast %45 : vector<1x16xf32> to vector<8x16xf32>
    %47 = arith.addf %44, %46 : vector<8x16xf32>
    %48 = tpu.iota {dimensions = array<i32: 1>} : vector<8x16xi32>
    %cst_20 = arith.constant dense<0xFF800000> : vector<8xf32>
    %49 = vector.multi_reduction <maximumf>, %47, %cst_20 [1] : vector<8x16xf32> to vector<8xf32>
    %50 = vector.shape_cast %49 : vector<8xf32> to vector<8x1xf32>
    %51 = vector.broadcast %50 : vector<8x1xf32> to vector<8x16xf32>
    %52 = arith.cmpf oeq, %47, %51 : vector<8x16xf32>
    %c16_i32 = arith.constant 16 : i32
    %53 = vector.broadcast %c16_i32 : i32 to vector<8x16xi32>
    %54 = arith.select %52, %48, %53 : vector<8x16xi1>, vector<8x16xi32>
    %cst_21 = arith.constant dense<2147483647> : vector<8xi32>
    %55 = vector.multi_reduction <minsi>, %54, %cst_21 [1] : vector<8x16xi32> to vector<8xi32>
    %56 = vector.shape_cast %55 : vector<8xi32> to vector<8x1xi32>
    %c0_22 = arith.constant 0 : index
    %c0_23 = arith.constant 0 : index
    %57 = vector.load %arg6[%c0_22, %c0_23] : memref<8x1xi32, #tpu.memory_space<vmem>>, vector<8x1xi32>
    tpu.vector_store %arg6[%c0_22, %c0_23], %56 {strides = array<i32>} : memref<8x1xi32, #tpu.memory_space<vmem>>, vector<8x1xi32>,
    return
  }
}

</mosaic_0001>

<llo_original>
// kernel: speech_recognizer_forward.1
$region0: #{speech_recognizer_forward.1}
  #allocation0 [shape = 'u32[]', space=smem, size = 0x4, offset = 0x4, fixed_abs, tag = 'smem constant byte address 0x4 - core index']
  #allocation1 [shape = 'u32[144,128]{1,0:T(1,128)}', space=vmem, size = 0x12000, scoped, tag = 'internal scratch']
  %s0 = inlined_call_operand.vmem [shape: f32[64,16], index: 0, kind: input, shape index: {}]
  %s1 = inlined_call_operand.vmem [shape: f32[16,64], index: 1, kind: input, shape index: {}]
  %s2 = inlined_call_operand.vmem [shape: f32[1,64], index: 2, kind: input, shape index: {}]
  %s3 = inlined_call_operand.vmem [shape: f32[64,64], index: 3, kind: input, shape index: {}]
  %s4 = inlined_call_operand.vmem [shape: f32[32,16], index: 4, kind: input, shape index: {}]
  %s5 = inlined_call_operand.vmem [shape: f32[1,16], index: 5, kind: input, shape index: {}]
  %s6 = inlined_call_operand.vmem [shape: s32[8,1], index: 6, kind: output, shape index: {}]
  %s7 = sld [smem:[#allocation0]]
  $region34: #{speech_recognizer_forward.1} parent=0
    _
  %s9 = ssub.s32 1, %s7
  %s10 = scalar_select 0, %s9, %s7
  // Predicated region
  $region2: #{speech_recognizer_forward.1} parent=0 // pred_check
    _
  $region3: #{speech_recognizer_forward.1} parent=0 // pred_check_branch
    %12 = sbr.rel (0) target = $region5
  $region4: #{speech_recognizer_forward.1} parent=0 // pred_region
    _
  $region5: #{speech_recognizer_forward.1} parent=0 // pred_fallthru
    _
  // Predicated region
  $region6: #{speech_recognizer_forward.1} parent=0 // pred_check
    _
  $region7: #{speech_recognizer_forward.1} parent=0 // pred_check_branch
    %14 = sbr.rel (0) target = $region9
  $region8: #{speech_recognizer_forward.1} parent=0 // pred_region
    _
  $region9: #{speech_recognizer_forward.1} parent=0 // pred_fallthru
    _
  // Predicated region
  $region10: #{speech_recognizer_forward.1} parent=0 // pred_check
    _
  $region11: #{speech_recognizer_forward.1} parent=0 // pred_check_branch
    %16 = sbr.rel (0) target = $region13
  $region12: #{speech_recognizer_forward.1} parent=0 // pred_region
    _
  $region13: #{speech_recognizer_forward.1} parent=0 // pred_fallthru
    _
  // Predicated region
  $region14: #{speech_recognizer_forward.1} parent=0 // pred_check
    _
  $region15: #{speech_recognizer_forward.1} parent=0 // pred_check_branch
    %18 = sbr.rel (0) target = $region17
  $region16: #{speech_recognizer_forward.1} parent=0 // pred_region
    _
  $region17: #{speech_recognizer_forward.1} parent=0 // pred_fallthru
    _
  // Predicated region
  $region18: #{speech_recognizer_forward.1} parent=0 // pred_check
    _
  $region19: #{speech_recognizer_forward.1} parent=0 // pred_check_branch
    %20 = sbr.rel (0) target = $region21
  $region20: #{speech_recognizer_forward.1} parent=0 // pred_region
    _
  $region21: #{speech_recognizer_forward.1} parent=0 // pred_fallthru
    _
  // Predicated region
  $region22: #{speech_recognizer_forward.1} parent=0 // pred_check
    _
  $region23: #{speech_recognizer_forward.1} parent=0 // pred_check_branch
    %22 = sbr.rel (0) target = $region25
  $region24: #{speech_recognizer_forward.1} parent=0 // pred_region
    _
  $region25: #{speech_recognizer_forward.1} parent=0 // pred_fallthru
    _
  %v23 = vld [vmem:[%s0] sm:$0xff]
  %v24 = vld [vmem:[%s0 + $0x8] sm:$0xff]
  %v25 = vld [vmem:[%s0 + $0x10] sm:$0xff]
  %v26 = vld [vmem:[%s0 + $0x18] sm:$0xff]
  %v27 = vld [vmem:[%s0 + $0x20] sm:$0xff]
  %v28 = vld [vmem:[%s0 + $0x28] sm:$0xff]
  %v29 = vld [vmem:[%s0 + $0x30] sm:$0xff]
  %v30 = vld [vmem:[%s0 + $0x38] sm:$0xff]
  %v31 = vld [vmem:[%s1] sm:$0xff]
  %v32 = vld [vmem:[%s1 + $0x8] sm:$0xff]
  %v33 = vld [vmem:[%s2] sm:$0x1]
  %v35 = vlaneseq
  %v36 = vshrl.u32 %v35, 7
  %v37 = vsub.s32 0, %v36
  %v38 = vrot.slane %v33, %v37
  %vm40 = vcmask 130048
  %v42 = vsel %vm40, %v23, 0
  %v45 = vsel %vm40, %v24, 0
  %v48 = vsel %vm40, %v25, 0
  %v51 = vsel %vm40, %v26, 0
  %v54 = vsel %vm40, %v27, 0
  %v57 = vsel %vm40, %v28, 0
  %v60 = vsel %vm40, %v29, 0
  %v63 = vsel %vm40, %v30, 0
  %65 = vmatprep.subr.mxu0 0.0
  %66 = vmatpush1.msra.mxu0 0.0
  %67 = vmatprep.subr.mxu0 0.0
  %68 = vmatpush1.msra.mxu0 0.0
  %69 = vmatprep.subr.mxu0 0.0
  %70 = vmatpush1.msra.mxu0 0.0
  %71 = vmatprep.subr.mxu0 0.0
  %72 = vmatpush1.msra.mxu0 0.0
  %73 = vmatprep.subr.mxu0 0.0
  %74 = vmatpush1.msra.mxu0 0.0
  %75 = vmatprep.subr.mxu0 0.0
  %76 = vmatpush1.msra.mxu0 0.0
  %77 = vmatprep.subr.mxu0 0.0
  %78 = vmatpush1.msra.mxu0 0.0
  %79 = vmatprep.subr.mxu0 0.0
  %80 = vmatpush1.msra.mxu0 0.0
  %81 = vmatprep.subr.mxu0 0.0
  %82 = vmatpush1.msra.mxu0 0.0
  %83 = vmatprep.subr.mxu0 0.0
  %84 = vmatpush1.msra.mxu0 0.0
  %85 = vmatprep.subr.mxu0 0.0
  %86 = vmatpush1.msra.mxu0 0.0
  %87 = vmatprep.subr.mxu0 0.0
  %88 = vmatpush1.msra.mxu0 0.0
  %89 = vmatprep.subr.mxu0 0.0
  %90 = vmatpush1.msra.mxu0 0.0
  %91 = vmatprep.subr.mxu0 0.0
  %92 = vmatpush1.msra.mxu0 0.0
  %93 = vmatprep.subr.mxu0 0.0
  %94 = vmatpush1.msra.mxu0 %v32
  %95 = vmatprep.subr.mxu0 0.0
  %96 = vmatpush1.msra.mxu0 %v31
  %97 = vmatprep.subr.mxu0 0.0
  %98 = vmatpush2.msra.mxu0 0.0
  %99 = vmatprep.subr.mxu0 0.0
  %100 = vmatpush2.msra.mxu0 0.0
  %101 = vmatprep.subr.mxu0 0.0
  %102 = vmatpush2.msra.mxu0 0.0
  %103 = vmatprep.subr.mxu0 0.0
  %104 = vmatpush2.msra.mxu0 0.0
  %105 = vmatprep.subr.mxu0 0.0
  %106 = vmatpush2.msra.mxu0 0.0
  %107 = vmatprep.subr.mxu0 0.0
  %108 = vmatpush2.msra.mxu0 0.0
  %109 = vmatprep.subr.mxu0 0.0
  %110 = vmatpush2.msra.mxu0 0.0
  %111 = vmatprep.subr.mxu0 0.0
  %112 = vmatpush2.msra.mxu0 0.0
  %113 = vmatprep.subr.mxu0 0.0
  %114 = vmatpush2.msra.mxu0 0.0
  %115 = vmatprep.subr.mxu0 0.0
  %116 = vmatpush2.msra.mxu0 0.0
  %117 = vmatprep.subr.mxu0 0.0
  %118 = vmatpush2.msra.mxu0 0.0
  %119 = vmatprep.subr.mxu0 0.0
  %120 = vmatpush2.msra.mxu0 0.0
  %121 = vmatprep.subr.mxu0 0.0
  %122 = vmatpush2.msra.mxu0 0.0
  %123 = vmatprep.subr.mxu0 0.0
  %124 = vmatpush2.msra.mxu0 0.0
  %125 = vmatprep.subr.mxu0 0.0
  %126 = vmatpush2.msra.mxu0 0.0
  %127 = vmatprep.subr.mxu0 0.0
  %128 = vmatpush2.msra.mxu0 0.0
  %129 = vmatprep.mubr.f32.mxu0 0.0
  %130 = vmatmul.mubr.f32.gmra.mxu0 %v42
  %v131 = vpop.f32.mrf.mxu0
  %v132 = vadd.f32 %v38, %v131
  %v133 = vpop.f32.mrf.mxu0
  %134 = vmatprep.mubr.f32.mxu0 0.0
  %135 = vmatmul.mubr.f32.gmra.mxu0 %v45
  %v136 = vpop.f32.mrf.mxu0
  %v137 = vadd.f32 %v38, %v136
  %v138 = vpop.f32.mrf.mxu0
  %139 = vmatprep.mubr.f32.mxu0 0.0
  %140 = vmatmul.mubr.f32.gmra.mxu0 %v48
  %v141 = vpop.f32.mrf.mxu0
  %v142 = vadd.f32 %v38, %v141
  %v143 = vpop.f32.mrf.mxu0
  %144 = vmatprep.mubr.f32.mxu0 0.0
  %145 = vmatmul.mubr.f32.gmra.mxu0 %v51
  %v146 = vpop.f32.mrf.mxu0
  %v147 = vadd.f32 %v38, %v146
  %v148 = vpop.f32.mrf.mxu0
  %149 = vmatprep.mubr.f32.mxu0 0.0
  %150 = vmatmul.mubr.f32.gmra.mxu0 %v54
  %v151 = vpop.f32.mrf.mxu0
  %v152 = vadd.f32 %v38, %v151
  %v153 = vpop.f32.mrf.mxu0
  %154 = vmatprep.mubr.f32.mxu0 0.0
  %155 = vmatmul.mubr.f32.gmra.mxu0 %v57
  %v156 = vpop.f32.mrf.mxu0
  %v157 = vadd.f32 %v38, %v156
  %v158 = vpop.f32.mrf.mxu0
  %159 = vmatprep.mubr.f32.mxu0 0.0
  %160 = vmatmul.mubr.f32.gmra.mxu0 %v60
  %v161 = vpop.f32.mrf.mxu0
  %v162 = vadd.f32 %v38, %v161
  %v163 = vpop.f32.mrf.mxu0
  %164 = vmatprep.mubr.f32.mxu0 0.0
  %165 = vmatmul.mubr.f32.gmra.mxu0 %v63
  %v166 = vpop.f32.mrf.mxu0
  %v167 = vadd.f32 %v38, %v166
  %v168 = vpop.f32.mrf.mxu0
  %169 = vdwg.mxu0
  %v170 = vld [vmem:[%s3] sm:$0xff]
  %v171 = vld [vmem:[%s3 + $0x8] sm:$0xff]
  %v172 = vld [vmem:[%s3 + $0x10] sm:$0xff]
  %v173 = vld [vmem:[%s3 + $0x18] sm:$0xff]
  %v174 = vld [vmem:[%s3 + $0x20] sm:$0xff]
  %v175 = vld [vmem:[%s3 + $0x28] sm:$0xff]
  %v176 = vld [vmem:[%s3 + $0x30] sm:$0xff]
  %v177 = vld [vmem:[%s3 + $0x38] sm:$0xff]
  %v178 = vlaneseq
  %v179 = vand.u32 %v178, 127
  %vm180 = vcmp.lt.s32.totalorder %v179, 32
  %v181 = vtanh.pop %v132
  %v182 = vsel %vm180, %v181, 0.0
  %vm183 = vcmask 523264
  %v185 = vsel %vm183, %v182, 0
  %187 = vmatprep.subr.mxu0 0.0
  %188 = vmatpush1.msra.mxu0 0.0
  %189 = vmatprep.subr.mxu0 0.0
  %190 = vmatpush1.msra.mxu0 0.0
  %191 = vmatprep.subr.mxu0 0.0
  %192 = vmatpush1.msra.mxu0 0.0
  %193 = vmatprep.subr.mxu0 0.0
  %194 = vmatpush1.msra.mxu0 0.0
  %195 = vmatprep.subr.mxu0 0.0
  %196 = vmatpush1.msra.mxu0 0.0
  %197 = vmatprep.subr.mxu0 0.0
  %198 = vmatpush1.msra.mxu0 0.0
  %199 = vmatprep.subr.mxu0 0.0
  %200 = vmatpush1.msra.mxu0 0.0
  %201 = vmatprep.subr.mxu0 0.0
  %202 = vmatpush1.msra.mxu0 0.0
  %203 = vmatprep.subr.mxu0 0.0
  %204 = vmatpush1.msra.mxu0 %v177
  %205 = vmatprep.subr.mxu0 0.0
  %206 = vmatpush1.msra.mxu0 %v176
  %207 = vmatprep.subr.mxu0 0.0
  %208 = vmatpush1.msra.mxu0 %v175
  %209 = vmatprep.subr.mxu0 0.0
  %210 = vmatpush1.msra.mxu0 %v174
  %211 = vmatprep.subr.mxu0 0.0
  %212 = vmatpush1.msra.mxu0 %v173
  %213 = vmatprep.subr.mxu0 0.0
  %214 = vmatpush1.msra.mxu0 %v172
  %215 = vmatprep.subr.mxu0 0.0
  %216 = vmatpush1.msra.mxu0 %v171
  %217 = vmatprep.subr.mxu0 0.0
  %218 = vmatpush1.msra.mxu0 %v170
  %219 = vmatprep.subr.mxu0 0.0
  %220 = vmatpush2.msra.mxu0 0.0
  %221 = vmatprep.subr.mxu0 0.0
  %222 = vmatpush2.msra.mxu0 0.0
  %223 = vmatprep.subr.mxu0 0.0
  %224 = vmatpush2.msra.mxu0 0.0
  %225 = vmatprep.subr.mxu0 0.0
  %226 = vmatpush2.msra.mxu0 0.0
  %227 = vmatprep.subr.mxu0 0.0
  %228 = vmatpush2.msra.mxu0 0.0
  %229 = vmatprep.subr.mxu0 0.0
  %230 = vmatpush2.msra.mxu0 0.0
  %231 = vmatprep.subr.mxu0 0.0
  %232 = vmatpush2.msra.mxu0 0.0
  %233 = vmatprep.subr.mxu0 0.0
  %234 = vmatpush2.msra.mxu0 0.0
  %235 = vmatprep.subr.mxu0 0.0
  %236 = vmatpush2.msra.mxu0 0.0
  %237 = vmatprep.subr.mxu0 0.0
  %238 = vmatpush2.msra.mxu0 0.0
  %239 = vmatprep.subr.mxu0 0.0
  %240 = vmatpush2.msra.mxu0 0.0
  %241 = vmatprep.subr.mxu0 0.0
  %242 = vmatpush2.msra.mxu0 0.0
  %243 = vmatprep.subr.mxu0 0.0
  %244 = vmatpush2.msra.mxu0 0.0
  %245 = vmatprep.subr.mxu0 0.0
  %246 = vmatpush2.msra.mxu0 0.0
  %247 = vmatprep.subr.mxu0 0.0
  %248 = vmatpush2.msra.mxu0 0.0
  %249 = vmatprep.subr.mxu0 0.0
  %250 = vmatpush2.msra.mxu0 0.0
  %251 = vmatprep.mubr.f32.mxu0 0.0
  %252 = vmatmul.mubr.f32.gmra.mxu0 %v185
  %v253 = vpop.f32.mrf.mxu0
  %v254 = vadd.f32 0.0, %v253
  %v255 = vpop.f32.mrf.mxu0
  %256 = vdwg.mxu0
  %v257 = vadd.f32 %v137, %v254
  %v258 = vtanh.pop %v257
  %v260 = vsel %vm183, %v258, 0
  %262 = vmatprep.subr.mxu0 0.0
  %263 = vmatpush1.msra.mxu0 0.0
  %264 = vmatprep.subr.mxu0 0.0
  %265 = vmatpush1.msra.mxu0 0.0
  %266 = vmatprep.subr.mxu0 0.0
  %267 = vmatpush1.msra.mxu0 0.0
  %268 = vmatprep.subr.mxu0 0.0
  %269 = vmatpush1.msra.mxu0 0.0
  %270 = vmatprep.subr.mxu0 0.0
  %271 = vmatpush1.msra.mxu0 0.0
  %272 = vmatprep.subr.mxu0 0.0
  %273 = vmatpush1.msra.mxu0 0.0
  %274 = vmatprep.subr.mxu0 0.0
  %275 = vmatpush1.msra.mxu0 0.0
  %276 = vmatprep.subr.mxu0 0.0
  %277 = vmatpush1.msra.mxu0 0.0
  %278 = vmatprep.subr.mxu0 0.0
  %279 = vmatpush1.msra.mxu0 %v177
  %280 = vmatprep.subr.mxu0 0.0
  %281 = vmatpush1.msra.mxu0 %v176
  %282 = vmatprep.subr.mxu0 0.0
  %283 = vmatpush1.msra.mxu0 %v175
  %284 = vmatprep.subr.mxu0 0.0
  %285 = vmatpush1.msra.mxu0 %v174
  %286 = vmatprep.subr.mxu0 0.0
  %287 = vmatpush1.msra.mxu0 %v173
  %288 = vmatprep.subr.mxu0 0.0
  %289 = vmatpush1.msra.mxu0 %v172
  %290 = vmatprep.subr.mxu0 0.0
  %291 = vmatpush1.msra.mxu0 %v171
  %292 = vmatprep.subr.mxu0 0.0
  %293 = vmatpush1.msra.mxu0 %v170
  %294 = vmatprep.subr.mxu0 0.0
  %295 = vmatpush2.msra.mxu0 0.0
  %296 = vmatprep.subr.mxu0 0.0
  %297 = vmatpush2.msra.mxu0 0.0
  %298 = vmatprep.subr.mxu0 0.0
  %299 = vmatpush2.msra.mxu0 0.0
  %300 = vmatprep.subr.mxu0 0.0
  %301 = vmatpush2.msra.mxu0 0.0
  %302 = vmatprep.subr.mxu0 0.0
  %303 = vmatpush2.msra.mxu0 0.0
  %304 = vmatprep.subr.mxu0 0.0
  %305 = vmatpush2.msra.mxu0 0.0
  %306 = vmatprep.subr.mxu0 0.0
  %307 = vmatpush2.msra.mxu0 0.0
  %308 = vmatprep.subr.mxu0 0.0
  %309 = vmatpush2.msra.mxu0 0.0
  %310 = vmatprep.subr.mxu0 0.0
  %311 = vmatpush2.msra.mxu0 0.0
  %312 = vmatprep.subr.mxu0 0.0
  %313 = vmatpush2.msra.mxu0 0.0
  %314 = vmatprep.subr.mxu0 0.0
  %315 = vmatpush2.msra.mxu0 0.0
  %316 = vmatprep.subr.mxu0 0.0
  %317 = vmatpush2.msra.mxu0 0.0
  %318 = vmatprep.subr.mxu0 0.0
  %319 = vmatpush2.msra.mxu0 0.0
  %320 = vmatprep.subr.mxu0 0.0
  %321 = vmatpush2.msra.mxu0 0.0
  %322 = vmatprep.subr.mxu0 0.0
  %323 = vmatpush2.msra.mxu0 0.0
  %324 = vmatprep.subr.mxu0 0.0
  %325 = vmatpush2.msra.mxu0 0.0
  %326 = vmatprep.mubr.f32.mxu0 0.0
  %327 = vmatmul.mubr.f32.gmra.mxu0 %v260
  %v328 = vpop.f32.mrf.mxu0
  %v329 = vadd.f32 0.0, %v328
  %v330 = vpop.f32.mrf.mxu0
  %331 = vdwg.mxu0
  %v332 = vadd.f32 %v142, %v329
  %v333 = vtanh.pop %v332
  %v335 = vsel %vm183, %v333, 0
  %337 = vmatprep.subr.mxu0 0.0
  %338 = vmatpush1.msra.mxu0 0.0
  %339 = vmatprep.subr.mxu0 0.0
  %340 = vmatpush1.msra.mxu0 0.0
  %341 = vmatprep.subr.mxu0 0.0
  %342 = vmatpush1.msra.mxu0 0.0
  %343 = vmatprep.subr.mxu0 0.0
  %344 = vmatpush1.msra.mxu0 0.0
  %345 = vmatprep.subr.mxu0 0.0
  %346 = vmatpush1.msra.mxu0 0.0
  %347 = vmatprep.subr.mxu0 0.0
  %348 = vmatpush1.msra.mxu0 0.0
  %349 = vmatprep.subr.mxu0 0.0
  %350 = vmatpush1.msra.mxu0 0.0
  %351 = vmatprep.subr.mxu0 0.0
  %352 = vmatpush1.msra.mxu0 0.0
  %353 = vmatprep.subr.mxu0 0.0
  %354 = vmatpush1.msra.mxu0 %v177
  %355 = vmatprep.subr.mxu0 0.0
  %356 = vmatpush1.msra.mxu0 %v176
  %357 = vmatprep.subr.mxu0 0.0
  %358 = vmatpush1.msra.mxu0 %v175
  %359 = vmatprep.subr.mxu0 0.0
  %360 = vmatpush1.msra.mxu0 %v174
  %361 = vmatprep.subr.mxu0 0.0
  %362 = vmatpush1.msra.mxu0 %v173
  %363 = vmatprep.subr.mxu0 0.0
  %364 = vmatpush1.msra.mxu0 %v172
  %365 = vmatprep.subr.mxu0 0.0
  %366 = vmatpush1.msra.mxu0 %v171
  %367 = vmatprep.subr.mxu0 0.0
  %368 = vmatpush1.msra.mxu0 %v170
  %369 = vmatprep.subr.mxu0 0.0
  %370 = vmatpush2.msra.mxu0 0.0
  %371 = vmatprep.subr.mxu0 0.0
  %372 = vmatpush2.msra.mxu0 0.0
  %373 = vmatprep.subr.mxu0 0.0
  %374 = vmatpush2.msra.mxu0 0.0
  %375 = vmatprep.subr.mxu0 0.0
  %376 = vmatpush2.msra.mxu0 0.0
  %377 = vmatprep.subr.mxu0 0.0
  %378 = vmatpush2.msra.mxu0 0.0
  %379 = vmatprep.subr.mxu0 0.0
  %380 = vmatpush2.msra.mxu0 0.0
  %381 = vmatprep.subr.mxu0 0.0
  %382 = vmatpush2.msra.mxu0 0.0
  %383 = vmatprep.subr.mxu0 0.0
  %384 = vmatpush2.msra.mxu0 0.0
  %385 = vmatprep.subr.mxu0 0.0
  %386 = vmatpush2.msra.mxu0 0.0
  %387 = vmatprep.subr.mxu0 0.0
  %388 = vmatpush2.msra.mxu0 0.0
  %389 = vmatprep.subr.mxu0 0.0
  %390 = vmatpush2.msra.mxu0 0.0
  %391 = vmatprep.subr.mxu0 0.0
  %392 = vmatpush2.msra.mxu0 0.0
  %393 = vmatprep.subr.mxu0 0.0
  %394 = vmatpush2.msra.mxu0 0.0
  %395 = vmatprep.subr.mxu0 0.0
  %396 = vmatpush2.msra.mxu0 0.0
  %397 = vmatprep.subr.mxu0 0.0
  %398 = vmatpush2.msra.mxu0 0.0
  %399 = vmatprep.subr.mxu0 0.0
  %400 = vmatpush2.msra.mxu0 0.0
  %401 = vmatprep.mubr.f32.mxu0 0.0
  %402 = vmatmul.mubr.f32.gmra.mxu0 %v335
  %v403 = vpop.f32.mrf.mxu0
  %v404 = vadd.f32 0.0, %v403
  %v405 = vpop.f32.mrf.mxu0
  %406 = vdwg.mxu0
  %v407 = vadd.f32 %v147, %v404
  %v408 = vtanh.pop %v407
  %v410 = vsel %vm183, %v408, 0
  %412 = vmatprep.subr.mxu0 0.0
  %413 = vmatpush1.msra.mxu0 0.0
  %414 = vmatprep.subr.mxu0 0.0
  %415 = vmatpush1.msra.mxu0 0.0
  %416 = vmatprep.subr.mxu0 0.0
  %417 = vmatpush1.msra.mxu0 0.0
  %418 = vmatprep.subr.mxu0 0.0
  %419 = vmatpush1.msra.mxu0 0.0
  %420 = vmatprep.subr.mxu0 0.0
  %421 = vmatpush1.msra.mxu0 0.0
  %422 = vmatprep.subr.mxu0 0.0
  %423 = vmatpush1.msra.mxu0 0.0
  %424 = vmatprep.subr.mxu0 0.0
  %425 = vmatpush1.msra.mxu0 0.0
  %426 = vmatprep.subr.mxu0 0.0
  %427 = vmatpush1.msra.mxu0 0.0
  %428 = vmatprep.subr.mxu0 0.0
  %429 = vmatpush1.msra.mxu0 %v177
  %430 = vmatprep.subr.mxu0 0.0
  %431 = vmatpush1.msra.mxu0 %v176
  %432 = vmatprep.subr.mxu0 0.0
  %433 = vmatpush1.msra.mxu0 %v175
  %434 = vmatprep.subr.mxu0 0.0
  %435 = vmatpush1.msra.mxu0 %v174
  %436 = vmatprep.subr.mxu0 0.0
  %437 = vmatpush1.msra.mxu0 %v173
  %438 = vmatprep.subr.mxu0 0.0
  %439 = vmatpush1.msra.mxu0 %v172
  %440 = vmatprep.subr.mxu0 0.0
  %441 = vmatpush1.msra.mxu0 %v171
  %442 = vmatprep.subr.mxu0 0.0
  %443 = vmatpush1.msra.mxu0 %v170
  %444 = vmatprep.subr.mxu0 0.0
  %445 = vmatpush2.msra.mxu0 0.0
  %446 = vmatprep.subr.mxu0 0.0
  %447 = vmatpush2.msra.mxu0 0.0
  %448 = vmatprep.subr.mxu0 0.0
  %449 = vmatpush2.msra.mxu0 0.0
  %450 = vmatprep.subr.mxu0 0.0
  %451 = vmatpush2.msra.mxu0 0.0
  %452 = vmatprep.subr.mxu0 0.0
  %453 = vmatpush2.msra.mxu0 0.0
  %454 = vmatprep.subr.mxu0 0.0
  %455 = vmatpush2.msra.mxu0 0.0
  %456 = vmatprep.subr.mxu0 0.0
  %457 = vmatpush2.msra.mxu0 0.0
  %458 = vmatprep.subr.mxu0 0.0
  %459 = vmatpush2.msra.mxu0 0.0
  %460 = vmatprep.subr.mxu0 0.0
  %461 = vmatpush2.msra.mxu0 0.0
  %462 = vmatprep.subr.mxu0 0.0
  %463 = vmatpush2.msra.mxu0 0.0
  %464 = vmatprep.subr.mxu0 0.0
  %465 = vmatpush2.msra.mxu0 0.0
  %466 = vmatprep.subr.mxu0 0.0
  %467 = vmatpush2.msra.mxu0 0.0
  %468 = vmatprep.subr.mxu0 0.0
  %469 = vmatpush2.msra.mxu0 0.0
  %470 = vmatprep.subr.mxu0 0.0
  %471 = vmatpush2.msra.mxu0 0.0
  %472 = vmatprep.subr.mxu0 0.0
  %473 = vmatpush2.msra.mxu0 0.0
  %474 = vmatprep.subr.mxu0 0.0
  %475 = vmatpush2.msra.mxu0 0.0
  %476 = vmatprep.mubr.f32.mxu0 0.0
  %477 = vmatmul.mubr.f32.gmra.mxu0 %v410
  %v478 = vpop.f32.mrf.mxu0
  %v479 = vadd.f32 0.0, %v478
  %v480 = vpop.f32.mrf.mxu0
  %481 = vdwg.mxu0
  %v482 = vadd.f32 %v152, %v479
  %v483 = vtanh.pop %v482
  %v485 = vsel %vm183, %v483, 0
  %487 = vmatprep.subr.mxu0 0.0
  %488 = vmatpush1.msra.mxu0 0.0
  %489 = vmatprep.subr.mxu0 0.0
  %490 = vmatpush1.msra.mxu0 0.0
  %491 = vmatprep.subr.mxu0 0.0
  %492 = vmatpush1.msra.mxu0 0.0
  %493 = vmatprep.subr.mxu0 0.0
  %494 = vmatpush1.msra.mxu0 0.0
  %495 = vmatprep.subr.mxu0 0.0
  %496 = vmatpush1.msra.mxu0 0.0
  %497 = vmatprep.subr.mxu0 0.0
  %498 = vmatpush1.msra.mxu0 0.0
  %499 = vmatprep.subr.mxu0 0.0
  %500 = vmatpush1.msra.mxu0 0.0
  %501 = vmatprep.subr.mxu0 0.0
  %502 = vmatpush1.msra.mxu0 0.0
  %503 = vmatprep.subr.mxu0 0.0
  %504 = vmatpush1.msra.mxu0 %v177
  %505 = vmatprep.subr.mxu0 0.0
  %506 = vmatpush1.msra.mxu0 %v176
  %507 = vmatprep.subr.mxu0 0.0
  %508 = vmatpush1.msra.mxu0 %v175
  %509 = vmatprep.subr.mxu0 0.0
  %510 = vmatpush1.msra.mxu0 %v174
  %511 = vmatprep.subr.mxu0 0.0
  %512 = vmatpush1.msra.mxu0 %v173
  %513 = vmatprep.subr.mxu0 0.0
  %514 = vmatpush1.msra.mxu0 %v172
  %515 = vmatprep.subr.mxu0 0.0
  %516 = vmatpush1.msra.mxu0 %v171
  %517 = vmatprep.subr.mxu0 0.0
  %518 = vmatpush1.msra.mxu0 %v170
  %519 = vmatprep.subr.mxu0 0.0
  %520 = vmatpush2.msra.mxu0 0.0
  %521 = vmatprep.subr.mxu0 0.0
  %522 = vmatpush2.msra.mxu0 0.0
  %523 = vmatprep.subr.mxu0 0.0
  %524 = vmatpush2.msra.mxu0 0.0
  %525 = vmatprep.subr.mxu0 0.0
  %526 = vmatpush2.msra.mxu0 0.0
  %527 = vmatprep.subr.mxu0 0.0
  %528 = vmatpush2.msra.mxu0 0.0
  %529 = vmatprep.subr.mxu0 0.0
  %530 = vmatpush2.msra.mxu0 0.0
  %531 = vmatprep.subr.mxu0 0.0
  %532 = vmatpush2.msra.mxu0 0.0
  %533 = vmatprep.subr.mxu0 0.0
  %534 = vmatpush2.msra.mxu0 0.0
  %535 = vmatprep.subr.mxu0 0.0
  %536 = vmatpush2.msra.mxu0 0.0
  %537 = vmatprep.subr.mxu0 0.0
  %538 = vmatpush2.msra.mxu0 0.0
  %539 = vmatprep.subr.mxu0 0.0
  %540 = vmatpush2.msra.mxu0 0.0
  %541 = vmatprep.subr.mxu0 0.0
  %542 = vmatpush2.msra.mxu0 0.0
  %543 = vmatprep.subr.mxu0 0.0
  %544 = vmatpush2.msra.mxu0 0.0
  %545 = vmatprep.subr.mxu0 0.0
  %546 = vmatpush2.msra.mxu0 0.0
  %547 = vmatprep.subr.mxu0 0.0
  %548 = vmatpush2.msra.mxu0 0.0
  %549 = vmatprep.subr.mxu0 0.0
  %550 = vmatpush2.msra.mxu0 0.0
  %551 = vmatprep.mubr.f32.mxu0 0.0
  %552 = vmatmul.mubr.f32.gmra.mxu0 %v485
  %v553 = vpop.f32.mrf.mxu0
  %v554 = vadd.f32 0.0, %v553
  %v555 = vpop.f32.mrf.mxu0
  %556 = vdwg.mxu0
  %v557 = vadd.f32 %v157, %v554
  %v558 = vtanh.pop %v557
  %v560 = vsel %vm183, %v558, 0
  %562 = vmatprep.subr.mxu0 0.0
  %563 = vmatpush1.msra.mxu0 0.0
  %564 = vmatprep.subr.mxu0 0.0
  %565 = vmatpush1.msra.mxu0 0.0
  %566 = vmatprep.subr.mxu0 0.0
  %567 = vmatpush1.msra.mxu0 0.0
  %568 = vmatprep.subr.mxu0 0.0
  %569 = vmatpush1.msra.mxu0 0.0
  %570 = vmatprep.subr.mxu0 0.0
  %571 = vmatpush1.msra.mxu0 0.0
  %572 = vmatprep.subr.mxu0 0.0
  %573 = vmatpush1.msra.mxu0 0.0
  %574 = vmatprep.subr.mxu0 0.0
  %575 = vmatpush1.msra.mxu0 0.0
  %576 = vmatprep.subr.mxu0 0.0
  %577 = vmatpush1.msra.mxu0 0.0
  %578 = vmatprep.subr.mxu0 0.0
  %579 = vmatpush1.msra.mxu0 %v177
  %580 = vmatprep.subr.mxu0 0.0
  %581 = vmatpush1.msra.mxu0 %v176
  %582 = vmatprep.subr.mxu0 0.0
  %583 = vmatpush1.msra.mxu0 %v175
  %584 = vmatprep.subr.mxu0 0.0
  %585 = vmatpush1.msra.mxu0 %v174
  %586 = vmatprep.subr.mxu0 0.0
  %587 = vmatpush1.msra.mxu0 %v173
  %588 = vmatprep.subr.mxu0 0.0
  %589 = vmatpush1.msra.mxu0 %v172
  %590 = vmatprep.subr.mxu0 0.0
  %591 = vmatpush1.msra.mxu0 %v171
  %592 = vmatprep.subr.mxu0 0.0
  %593 = vmatpush1.msra.mxu0 %v170
  %594 = vmatprep.subr.mxu0 0.0
  %595 = vmatpush2.msra.mxu0 0.0
  %596 = vmatprep.subr.mxu0 0.0
  %597 = vmatpush2.msra.mxu0 0.0
  %598 = vmatprep.subr.mxu0 0.0
  %599 = vmatpush2.msra.mxu0 0.0
  %600 = vmatprep.subr.mxu0 0.0
  %601 = vmatpush2.msra.mxu0 0.0
  %602 = vmatprep.subr.mxu0 0.0
  %603 = vmatpush2.msra.mxu0 0.0
  %604 = vmatprep.subr.mxu0 0.0
  %605 = vmatpush2.msra.mxu0 0.0
  %606 = vmatprep.subr.mxu0 0.0
  %607 = vmatpush2.msra.mxu0 0.0
  %608 = vmatprep.subr.mxu0 0.0
  %609 = vmatpush2.msra.mxu0 0.0
  %610 = vmatprep.subr.mxu0 0.0
  %611 = vmatpush2.msra.mxu0 0.0
  %612 = vmatprep.subr.mxu0 0.0
  %613 = vmatpush2.msra.mxu0 0.0
  %614 = vmatprep.subr.mxu0 0.0
  %615 = vmatpush2.msra.mxu0 0.0
  %616 = vmatprep.subr.mxu0 0.0
  %617 = vmatpush2.msra.mxu0 0.0
  %618 = vmatprep.subr.mxu0 0.0
  %619 = vmatpush2.msra.mxu0 0.0
  %620 = vmatprep.subr.mxu0 0.0
  %621 = vmatpush2.msra.mxu0 0.0
  %622 = vmatprep.subr.mxu0 0.0
  %623 = vmatpush2.msra.mxu0 0.0
  %624 = vmatprep.subr.mxu0 0.0
  %625 = vmatpush2.msra.mxu0 0.0
  %626 = vmatprep.mubr.f32.mxu0 0.0
  %627 = vmatmul.mubr.f32.gmra.mxu0 %v560
  %v628 = vpop.f32.mrf.mxu0
  %v629 = vadd.f32 0.0, %v628
  %v630 = vpop.f32.mrf.mxu0
  %631 = vdwg.mxu0
  %v632 = vadd.f32 %v162, %v629
  %v633 = vtanh.pop %v632
  %v635 = vsel %vm183, %v633, 0
  %637 = vmatprep.subr.mxu0 0.0
  %638 = vmatpush1.msra.mxu0 0.0
  %639 = vmatprep.subr.mxu0 0.0
  %640 = vmatpush1.msra.mxu0 0.0
  %641 = vmatprep.subr.mxu0 0.0
  %642 = vmatpush1.msra.mxu0 0.0
  %643 = vmatprep.subr.mxu0 0.0
  %644 = vmatpush1.msra.mxu0 0.0
  %645 = vmatprep.subr.mxu0 0.0
  %646 = vmatpush1.msra.mxu0 0.0
  %647 = vmatprep.subr.mxu0 0.0
  %648 = vmatpush1.msra.mxu0 0.0
  %649 = vmatprep.subr.mxu0 0.0
  %650 = vmatpush1.msra.mxu0 0.0
  %651 = vmatprep.subr.mxu0 0.0
  %652 = vmatpush1.msra.mxu0 0.0
  %653 = vmatprep.subr.mxu0 0.0
  %654 = vmatpush1.msra.mxu0 %v177
  %655 = vmatprep.subr.mxu0 0.0
  %656 = vmatpush1.msra.mxu0 %v176
  %657 = vmatprep.subr.mxu0 0.0
  %658 = vmatpush1.msra.mxu0 %v175
  %659 = vmatprep.subr.mxu0 0.0
  %660 = vmatpush1.msra.mxu0 %v174
  %661 = vmatprep.subr.mxu0 0.0
  %662 = vmatpush1.msra.mxu0 %v173
  %663 = vmatprep.subr.mxu0 0.0
  %664 = vmatpush1.msra.mxu0 %v172
  %665 = vmatprep.subr.mxu0 0.0
  %666 = vmatpush1.msra.mxu0 %v171
  %667 = vmatprep.subr.mxu0 0.0
  %668 = vmatpush1.msra.mxu0 %v170
  %669 = vmatprep.subr.mxu0 0.0
  %670 = vmatpush2.msra.mxu0 0.0
  %671 = vmatprep.subr.mxu0 0.0
  %672 = vmatpush2.msra.mxu0 0.0
  %673 = vmatprep.subr.mxu0 0.0
  %674 = vmatpush2.msra.mxu0 0.0
  %675 = vmatprep.subr.mxu0 0.0
  %676 = vmatpush2.msra.mxu0 0.0
  %677 = vmatprep.subr.mxu0 0.0
  %678 = vmatpush2.msra.mxu0 0.0
  %679 = vmatprep.subr.mxu0 0.0
  %680 = vmatpush2.msra.mxu0 0.0
  %681 = vmatprep.subr.mxu0 0.0
  %682 = vmatpush2.msra.mxu0 0.0
  %683 = vmatprep.subr.mxu0 0.0
  %684 = vmatpush2.msra.mxu0 0.0
  %685 = vmatprep.subr.mxu0 0.0
  %686 = vmatpush2.msra.mxu0 0.0
  %687 = vmatprep.subr.mxu0 0.0
  %688 = vmatpush2.msra.mxu0 0.0
  %689 = vmatprep.subr.mxu0 0.0
  %690 = vmatpush2.msra.mxu0 0.0
  %691 = vmatprep.subr.mxu0 0.0
  %692 = vmatpush2.msra.mxu0 0.0
  %693 = vmatprep.subr.mxu0 0.0
  %694 = vmatpush2.msra.mxu0 0.0
  %695 = vmatprep.subr.mxu0 0.0
  %696 = vmatpush2.msra.mxu0 0.0
  %697 = vmatprep.subr.mxu0 0.0
  %698 = vmatpush2.msra.mxu0 0.0
  %699 = vmatprep.subr.mxu0 0.0
  %700 = vmatpush2.msra.mxu0 0.0
  %701 = vmatprep.mubr.f32.mxu0 0.0
  %702 = vmatmul.mubr.f32.gmra.mxu0 %v635
  %v703 = vpop.f32.mrf.mxu0
  %v704 = vadd.f32 0.0, %v703
  %v705 = vpop.f32.mrf.mxu0
  %706 = vdwg.mxu0
  %v707 = vadd.f32 %v167, %v704
  %v708 = vtanh.pop %v707
  %v709 = vld [vmem:[%s4] sm:$0xff]
  %v710 = vld [vmem:[%s4 + $0x8] sm:$0xff]
  %v711 = vld [vmem:[%s4 + $0x10] sm:$0xff]
  %v712 = vld [vmem:[%s4 + $0x18] sm:$0xff]
  %v713 = vld [vmem:[%s5] sm:$0x1]
  %v715 = vlaneseq
  %v716 = vshrl.u32 %v715, 7
  %v717 = vsub.s32 0, %v716
  %v718 = vrot.slane %v713, %v717
  %721 = vrot.lane.b32.xlu0 %v708, 96
  %v722 = vpop.permute.xlu0 %721
  %vm723 = vcmask 261120
  %v724 = vsel %vm723, %v722, 0
  %726 = vmatprep.subr.mxu0 0.0
  %727 = vmatpush1.msra.mxu0 0.0
  %728 = vmatprep.subr.mxu0 0.0
  %729 = vmatpush1.msra.mxu0 0.0
  %730 = vmatprep.subr.mxu0 0.0
  %731 = vmatpush1.msra.mxu0 0.0
  %732 = vmatprep.subr.mxu0 0.0
  %733 = vmatpush1.msra.mxu0 0.0
  %734 = vmatprep.subr.mxu0 0.0
  %735 = vmatpush1.msra.mxu0 0.0
  %736 = vmatprep.subr.mxu0 0.0
  %737 = vmatpush1.msra.mxu0 0.0
  %738 = vmatprep.subr.mxu0 0.0
  %739 = vmatpush1.msra.mxu0 0.0
  %740 = vmatprep.subr.mxu0 0.0
  %741 = vmatpush1.msra.mxu0 0.0
  %742 = vmatprep.subr.mxu0 0.0
  %743 = vmatpush1.msra.mxu0 0.0
  %744 = vmatprep.subr.mxu0 0.0
  %745 = vmatpush1.msra.mxu0 0.0
  %746 = vmatprep.subr.mxu0 0.0
  %747 = vmatpush1.msra.mxu0 0.0
  %748 = vmatprep.subr.mxu0 0.0
  %749 = vmatpush1.msra.mxu0 0.0
  %750 = vmatprep.subr.mxu0 0.0
  %751 = vmatpush1.msra.mxu0 %v712
  %752 = vmatprep.subr.mxu0 0.0
  %753 = vmatpush1.msra.mxu0 %v711
  %754 = vmatprep.subr.mxu0 0.0
  %755 = vmatpush1.msra.mxu0 %v710
  %756 = vmatprep.subr.mxu0 0.0
  %757 = vmatpush1.msra.mxu0 %v709
  %758 = vmatprep.subr.mxu0 0.0
  %759 = vmatpush2.msra.mxu0 0.0
  %760 = vmatprep.subr.mxu0 0.0
  %761 = vmatpush2.msra.mxu0 0.0
  %762 = vmatprep.subr.mxu0 0.0
  %763 = vmatpush2.msra.mxu0 0.0
  %764 = vmatprep.subr.mxu0 0.0
  %765 = vmatpush2.msra.mxu0 0.0
  %766 = vmatprep.subr.mxu0 0.0
  %767 = vmatpush2.msra.mxu0 0.0
  %768 = vmatprep.subr.mxu0 0.0
  %769 = vmatpush2.msra.mxu0 0.0
  %770 = vmatprep.subr.mxu0 0.0
  %771 = vmatpush2.msra.mxu0 0.0
  %772 = vmatprep.subr.mxu0 0.0
  %773 = vmatpush2.msra.mxu0 0.0
  %774 = vmatprep.subr.mxu0 0.0
  %775 = vmatpush2.msra.mxu0 0.0
  %776 = vmatprep.subr.mxu0 0.0
  %777 = vmatpush2.msra.mxu0 0.0
  %778 = vmatprep.subr.mxu0 0.0
  %779 = vmatpush2.msra.mxu0 0.0
  %780 = vmatprep.subr.mxu0 0.0
  %781 = vmatpush2.msra.mxu0 0.0
  %782 = vmatprep.subr.mxu0 0.0
  %783 = vmatpush2.msra.mxu0 0.0
  %784 = vmatprep.subr.mxu0 0.0
  %785 = vmatpush2.msra.mxu0 0.0
  %786 = vmatprep.subr.mxu0 0.0
  %787 = vmatpush2.msra.mxu0 0.0
  %788 = vmatprep.subr.mxu0 0.0
  %789 = vmatpush2.msra.mxu0 0.0
  %790 = vmatprep.mubr.f32.mxu0 0.0
  %791 = vmatmul.mubr.f32.gmra.mxu0 %v724
  %v792 = vpop.f32.mrf.mxu0
  %v793 = vadd.f32 %v718, %v792
  %v794 = vpop.f32.mrf.mxu0
  %795 = vdwg.mxu0
  %v796 = vsel %vm40, %v793, -inf
  %797 = vmax.xlane.f32.xlu0 %v796
  %v798 = vpop.xlane.xlu0 %797
  %vm799 = vcmp.eq.f32.partialorder %v793, %v798
  %v800 = vsel %vm799, %v179, 16
  %v801 = vsel %vm40, %v800, 2147483647
  %v802 = vand.u32 %v801, 65535
  %v803 = vshra.s32 %v801, 16
  %v804 = vcvt.s32.f32 %v802
  %v805 = vcvt.s32.f32 %v803
  %806 = vmin.xlane.f32.xlu0 %v805
  %v807 = vpop.xlane.xlu0 %806
  %vm808 = vcmp.eq.f32.partialorder %v805, %v807
  %v809 = vsel %vm808, %v804, inf
  %810 = vmin.xlane.f32.xlu0 %v809
  %v811 = vpop.xlane.xlu0 %810
  %v812 = vcvt.f32.s32 %v811
  %v813 = vcvt.f32.s32 %v807
  %v814 = vshll.u32 %v813, 16
  %v815 = vadd.s32 %v814, %v812
  %vm816 = vcmask 7168
  %817 = vst.msk [vmem:[%s6] sm:$0xff] %vm816, %v815
  // Predicated region
  $region26: #{speech_recognizer_forward.1} parent=0 // pred_check
    _
  $region27: #{speech_recognizer_forward.1} parent=0 // pred_check_branch
    %819 = sbr.rel (0) target = $region29
  $region28: #{speech_recognizer_forward.1} parent=0 // pred_region
    _
  $region29: #{speech_recognizer_forward.1} parent=0 // pred_fallthru
    _
  // Predicated region
  $region30: #{speech_recognizer_forward.1} parent=0 // pred_check
    _
  $region31: #{speech_recognizer_forward.1} parent=0 // pred_check_branch
    %821 = sbr.rel (0) target = $region33
  $region32: #{speech_recognizer_forward.1} parent=0 // pred_region
    _
  $region33: #{speech_recognizer_forward.1} parent=0 // pred_fallthru
    _

</llo_original>
